<compile_context>
chip_gen: v7x
topology: tpu7x:2x2x1
jax: 0.10.0
libtpu: 0.0.40
codegen_flags: <defaults>
</compile_context>

<pallas_src>
import functools
import math

import jax
import jax.numpy as jnp
import numpy as np
from jax.experimental import pallas as pl
from jax.experimental.pallas import tpu as pltpu


_LANE = 128
_VREG_TILE_BYTES = 8 * 128 * 4     # one (sublane-tile x 128-lane) tile = 4 KiB, any dtype
_RESIDENT_UNROLL_CAP = 256         # max tokens per grid step, resident-table path
_HBM_UNROLL_CAP = 512              # max row DMAs issued per grid step, HBM path


def _sublane_granule(dtype) -> int:
    """Minimum sublane multiple for a dense block of `dtype` (f32:8, bf16:16, i8:32)."""
    return max(8, 32 // jnp.dtype(dtype).itemsize)


def _round_up(x, m):
    return ((x + m - 1) // m) * m


def _pick_tile(n_tok, granule, cap):
    """Largest tile <= cap (multiple of granule) that still yields >= 2 grid steps."""
    half = (n_tok + 1) // 2
    tile = _round_up(max(half, 1), granule)
    return max(granule, min(cap, tile))


def _vmem_capacity_bytes() -> int:
    try:
        return int(pltpu.get_tpu_info().vmem_capacity_bytes)
    except Exception:
        return 64 << 20  # conservative (v7x-sized) fallback


# ----------------------------------------------------------------------------
# Path A: table resident in VMEM (small/medium vocab). No per-row HBM DMAs.
# ----------------------------------------------------------------------------
def _resident_kernel(idx_ref, table_ref, o_ref, *, scale, tok_tile):
    """idx_ref: SMEM i32[n_tok_pad]; table_ref: VMEM [vocab,1,d]; o_ref: VMEM [tile,d]."""
    base = pl.program_id(0) * tok_tile
    # Static unroll: store offsets are static; only the table-row index is
    # dynamic, and it sits on the leading (non-tiled) dim -> plain dynamic vld.
    for t in range(tok_tile):
        row = table_ref[idx_ref[base + t]]                    # (1, d_model)
        o_ref[pl.ds(t, 1), :] = (row.astype(jnp.float32) * scale).astype(o_ref.dtype)


# ----------------------------------------------------------------------------
# Path B: table stays in HBM (large vocab). Per-row DMA gather, single wait.
# ----------------------------------------------------------------------------
def _hbm_gather_kernel(idx_ref, table_ref, o_ref, sem, *, scale, tok_tile):
    """idx_ref: SMEM i32; table_ref: HBM [vocab,d] (pl.ANY); o_ref: VMEM [tile,d]."""
    base = pl.program_id(0) * tok_tile

    # Issue every row copy first (all SMEM index reads happen before any wait),
    # so tok_tile transfers are concurrently in flight on the DMA engine.
    # Rows land directly in the output VMEM window -- no staging scratch.
    for t in range(tok_tile):
        row = idx_ref[base + t]
        pltpu.make_async_copy(
            table_ref.at[pl.ds(row, 1), :],
            o_ref.at[pl.ds(t, 1), :],
            sem,
        ).start()

    # One aggregate wait: DMA semaphores count bytes, so waiting on a descriptor
    # covering the whole (tok_tile, d_model) block completes exactly when all
    # tok_tile row copies (tok_tile * d_model * itemsize bytes) have landed.
    pltpu.make_async_copy(table_ref.at[pl.ds(0, tok_tile), :], o_ref, sem).wait()

    # Fused epilogue: scale in place; dense, lane-aligned stores.
    o_ref[...] = (o_ref[...].astype(jnp.float32) * scale).astype(o_ref.dtype)


def embeddings_forward(x_ids, table, *, force_hbm_gather: bool = False):
    """Pallas equivalent of `Embeddings.forward`: table[x] * sqrt(d_model)."""
    vocab, d_model = table.shape
    out_dtype = table.dtype                      # native dtype end-to-end (review #6)
    tok_shape = x_ids.shape
    n_tok = int(np.prod(tok_shape)) if tok_shape else 1
    scale = float(math.sqrt(d_model))
    granule = _sublane_granule(out_dtype)

    # Clamp ids so a bad token can never trigger an out-of-bounds DMA/VMEM read.
    idx = jnp.clip(jnp.reshape(x_ids, (n_tok,)).astype(jnp.int32), 0, vocab - 1)

    # Generation-aware VMEM budgeting (v7x: 64 MiB, v5e/v6e: 128 MiB physical).
    vmem_cap = _vmem_capacity_bytes()
    vmem_limit = min(int(vmem_cap * 0.75), 112 << 20)
    resident_budget = vmem_limit // 2            # leave room for pipelined output blocks

    # Resident-table VMEM footprint: one (sublane-tile x 128-lane) tile per row
    # per 128 lanes -> vocab * ceil(d_model/128) * 4 KiB (dtype independent).
    lane_tiles = -(-d_model // _LANE)
    table_vmem_bytes = vocab * lane_tiles * _VREG_TILE_BYTES
    use_resident = (not force_hbm_gather) and (2 * table_vmem_bytes <= resident_budget)

    # Token tile: as large as the unroll/VMEM caps allow, but small enough that
    # the "parallel" grid has >= 2 steps (feeds both v7x TensorCores).
    out_row_bytes = d_model * jnp.dtype(out_dtype).itemsize
    io_cap = max(granule, (4 << 20) // max(out_row_bytes, 1))     # <= 4 MiB / out buffer
    cap = min(_RESIDENT_UNROLL_CAP if use_resident else _HBM_UNROLL_CAP, io_cap)
    cap = max(granule, (cap // granule) * granule)
    tile = _pick_tile(n_tok, granule, cap)
    if not use_resident:
        # Keep the aggregate-wait descriptor (a (tile, d_model) table slice) in
        # bounds; path-B tables are large so this essentially never binds.
        tile = min(tile, max(granule, (vocab // granule) * granule))

    n_pad = (-n_tok) % tile
    if n_pad:
        idx = jnp.concatenate([idx, jnp.zeros((n_pad,), jnp.int32)])
    n_tok_pad = n_tok + n_pad
    num_tiles = n_tok_pad // tile

    compiler_params = pltpu.CompilerParams(
        dimension_semantics=("parallel",),       # v7x: both TCs take token tiles
        vmem_limit_bytes=vmem_limit,
    )
    out_shape = jax.ShapeDtypeStruct((n_tok_pad, d_model), out_dtype)

    if use_resident:
        grid_spec = pltpu.PrefetchScalarGridSpec(
            num_scalar_prefetch=1,
            grid=(num_tiles,),
            in_specs=[
                # Full table as one block with a constant index_map -> fetched
                # from HBM exactly once and kept resident across all grid steps.
                pl.BlockSpec((vocab, 1, d_model), lambda i, idx_ref: (0, 0, 0)),
            ],
            out_specs=pl.BlockSpec((tile, d_model), lambda i, idx_ref: (i, 0)),
        )
        out = pl.pallas_call(
            functools.partial(_resident_kernel, scale=scale, tok_tile=tile),
            grid_spec=grid_spec,
            out_shape=out_shape,
            compiler_params=compiler_params,
        )(idx, table.reshape(vocab, 1, d_model))
    else:
        grid_spec = pltpu.PrefetchScalarGridSpec(
            num_scalar_prefetch=1,
            grid=(num_tiles,),
            in_specs=[pl.BlockSpec(memory_space=pl.ANY)],      # table stays in HBM
            out_specs=pl.BlockSpec((tile, d_model), lambda i, idx_ref: (i, 0)),
            scratch_shapes=[pltpu.SemaphoreType.DMA(())],      # one sem per step
        )
        out = pl.pallas_call(
            functools.partial(_hbm_gather_kernel, scale=scale, tok_tile=tile),
            grid_spec=grid_spec,
            out_shape=out_shape,
            compiler_params=compiler_params,
        )(idx, table)

    if n_pad:
        out = out[:n_tok]
    return out.reshape(*tok_shape, d_model)


if __name__ == "__main__":
    # Small shapes consistent with the module: batch=2, seq=8, d_model=128, vocab=512.
    d_model, vocab = 128, 512
    B, T = 2, 8

    key = jax.random.PRNGKey(0)
    k_tab, k_idx = jax.random.split(key)
    table = jax.random.normal(k_tab, (vocab, d_model), dtype=jnp.float32)  # nn.Embedding ~ N(0,1)
    x = jax.random.randint(k_idx, (B, T), 0, vocab, dtype=jnp.int32)

    fwd = jax.jit(embeddings_forward)
    out = jax.block_until_ready(fwd(x, table))

    # Pure-JAX reference: lut(x) * sqrt(d_model)
    ref = table[x] * math.sqrt(d_model)

    assert out.shape == (B, T, d_model), out.shape
    assert bool(jnp.all(jnp.isfinite(out)))
    np.testing.assert_allclose(np.asarray(out), np.asarray(ref), rtol=1e-6, atol=1e-6)
    print("KERNEL_OK")
</pallas_src>

<mosaic_0001>
module attributes {stable_mosaic.version = 11 : i64} {
  func.func @_resident_kernel(%arg0: i32, %arg1: memref<16xi32, #tpu.memory_space<smem>>, %arg2: memref<512x1x128xf32, #tpu.memory_space<vmem>>, %arg3: memref<8x128xf32, #tpu.memory_space<vmem>>) attributes {dimension_semantics = [#tpu.dimension_semantics<parallel>], iteration_bounds = array<i64: 2>, scalar_prefetch = 1 : i64, scratch_operands = 0 : i64, tpu.core_type = #tpu.core_type<tc>, window_params = [{pipeline_mode = #tpu.pipeline_mode<synchronous>, transform_indices = @transform_0, window_bounds = array<i64: 512, 1, 128>}, {transform_indices = @transform_1, window_bounds = array<i64: 8, 128>}]} {
    %c8_i32 = arith.constant 8 : i32
    %0 = arith.muli %arg0, %c8_i32 : i32
    %c0_i32 = arith.constant 0 : i32
    %1 = arith.addi %0, %c0_i32 : i32
    %2 = arith.index_cast %1 : i32 to index
    %3 = memref.load %arg1[%2] : memref<16xi32, #tpu.memory_space<smem>>
    %4 = arith.index_cast %3 : i32 to index
    %c0 = arith.constant 0 : index
    %c0_0 = arith.constant 0 : index
    %5 = vector.load %arg2[%4, %c0, %c0_0] : memref<512x1x128xf32, #tpu.memory_space<vmem>>, vector<1x1x128xf32>
    %6 = vector.shape_cast %5 : vector<1x1x128xf32> to vector<1x128xf32>
    %cst = arith.constant 11.3137083 : f32
    %7 = vector.broadcast %cst : f32 to vector<1x128xf32>
    %8 = arith.mulf %6, %7 : vector<1x128xf32>
    %c0_1 = arith.constant 0 : index
    %c0_2 = arith.constant 0 : index
    %9 = vector.load %arg3[%c0_1, %c0_2] : memref<8x128xf32, #tpu.memory_space<vmem>>, vector<1x128xf32>
    tpu.vector_store %arg3[%c0_1, %c0_2], %8 {strides = array<i32>} : memref<8x128xf32, #tpu.memory_space<vmem>>, vector<1x128xf32>,
    %c1_i32 = arith.constant 1 : i32
    %10 = arith.addi %0, %c1_i32 : i32
    %11 = arith.index_cast %10 : i32 to index
    %12 = memref.load %arg1[%11] : memref<16xi32, #tpu.memory_space<smem>>
    %13 = arith.index_cast %12 : i32 to index
    %c0_3 = arith.constant 0 : index
    %c0_4 = arith.constant 0 : index
    %14 = vector.load %arg2[%13, %c0_3, %c0_4] : memref<512x1x128xf32, #tpu.memory_space<vmem>>, vector<1x1x128xf32>
    %15 = vector.shape_cast %14 : vector<1x1x128xf32> to vector<1x128xf32>
    %cst_5 = arith.constant 11.3137083 : f32
    %16 = vector.broadcast %cst_5 : f32 to vector<1x128xf32>
    %17 = arith.mulf %15, %16 : vector<1x128xf32>
    %c1 = arith.constant 1 : index
    %c0_6 = arith.constant 0 : index
    %18 = vector.load %arg3[%c1, %c0_6] : memref<8x128xf32, #tpu.memory_space<vmem>>, vector<1x128xf32>
    tpu.vector_store %arg3[%c1, %c0_6], %17 {strides = array<i32>} : memref<8x128xf32, #tpu.memory_space<vmem>>, vector<1x128xf32>,
    %c2_i32 = arith.constant 2 : i32
    %19 = arith.addi %0, %c2_i32 : i32
    %20 = arith.index_cast %19 : i32 to index
    %21 = memref.load %arg1[%20] : memref<16xi32, #tpu.memory_space<smem>>
    %22 = arith.index_cast %21 : i32 to index
    %c0_7 = arith.constant 0 : index
    %c0_8 = arith.constant 0 : index
    %23 = vector.load %arg2[%22, %c0_7, %c0_8] : memref<512x1x128xf32, #tpu.memory_space<vmem>>, vector<1x1x128xf32>
    %24 = vector.shape_cast %23 : vector<1x1x128xf32> to vector<1x128xf32>
    %cst_9 = arith.constant 11.3137083 : f32
    %25 = vector.broadcast %cst_9 : f32 to vector<1x128xf32>
    %26 = arith.mulf %24, %25 : vector<1x128xf32>
    %c2 = arith.constant 2 : index
    %c0_10 = arith.constant 0 : index
    %27 = vector.load %arg3[%c2, %c0_10] : memref<8x128xf32, #tpu.memory_space<vmem>>, vector<1x128xf32>
    tpu.vector_store %arg3[%c2, %c0_10], %26 {strides = array<i32>} : memref<8x128xf32, #tpu.memory_space<vmem>>, vector<1x128xf32>,
    %c3_i32 = arith.constant 3 : i32
    %28 = arith.addi %0, %c3_i32 : i32
    %29 = arith.index_cast %28 : i32 to index
    %30 = memref.load %arg1[%29] : memref<16xi32, #tpu.memory_space<smem>>
    %31 = arith.index_cast %30 : i32 to index
    %c0_11 = arith.constant 0 : index
    %c0_12 = arith.constant 0 : index
    %32 = vector.load %arg2[%31, %c0_11, %c0_12] : memref<512x1x128xf32, #tpu.memory_space<vmem>>, vector<1x1x128xf32>
    %33 = vector.shape_cast %32 : vector<1x1x128xf32> to vector<1x128xf32>
    %cst_13 = arith.constant 11.3137083 : f32
    %34 = vector.broadcast %cst_13 : f32 to vector<1x128xf32>
    %35 = arith.mulf %33, %34 : vector<1x128xf32>
    %c3 = arith.constant 3 : index
    %c0_14 = arith.constant 0 : index
    %36 = vector.load %arg3[%c3, %c0_14] : memref<8x128xf32, #tpu.memory_space<vmem>>, vector<1x128xf32>
    tpu.vector_store %arg3[%c3, %c0_14], %35 {strides = array<i32>} : memref<8x128xf32, #tpu.memory_space<vmem>>, vector<1x128xf32>,
    %c4_i32 = arith.constant 4 : i32
    %37 = arith.addi %0, %c4_i32 : i32
    %38 = arith.index_cast %37 : i32 to index
    %39 = memref.load %arg1[%38] : memref<16xi32, #tpu.memory_space<smem>>
    %40 = arith.index_cast %39 : i32 to index
    %c0_15 = arith.constant 0 : index
    %c0_16 = arith.constant 0 : index
    %41 = vector.load %arg2[%40, %c0_15, %c0_16] : memref<512x1x128xf32, #tpu.memory_space<vmem>>, vector<1x1x128xf32>
    %42 = vector.shape_cast %41 : vector<1x1x128xf32> to vector<1x128xf32>
    %cst_17 = arith.constant 11.3137083 : f32
    %43 = vector.broadcast %cst_17 : f32 to vector<1x128xf32>
    %44 = arith.mulf %42, %43 : vector<1x128xf32>
    %c4 = arith.constant 4 : index
    %c0_18 = arith.constant 0 : index
    %45 = vector.load %arg3[%c4, %c0_18] : memref<8x128xf32, #tpu.memory_space<vmem>>, vector<1x128xf32>
    tpu.vector_store %arg3[%c4, %c0_18], %44 {strides = array<i32>} : memref<8x128xf32, #tpu.memory_space<vmem>>, vector<1x128xf32>,
    %c5_i32 = arith.constant 5 : i32
    %46 = arith.addi %0, %c5_i32 : i32
    %47 = arith.index_cast %46 : i32 to index
    %48 = memref.load %arg1[%47] : memref<16xi32, #tpu.memory_space<smem>>
    %49 = arith.index_cast %48 : i32 to index
    %c0_19 = arith.constant 0 : index
    %c0_20 = arith.constant 0 : index
    %50 = vector.load %arg2[%49, %c0_19, %c0_20] : memref<512x1x128xf32, #tpu.memory_space<vmem>>, vector<1x1x128xf32>
    %51 = vector.shape_cast %50 : vector<1x1x128xf32> to vector<1x128xf32>
    %cst_21 = arith.constant 11.3137083 : f32
    %52 = vector.broadcast %cst_21 : f32 to vector<1x128xf32>
    %53 = arith.mulf %51, %52 : vector<1x128xf32>
    %c5 = arith.constant 5 : index
    %c0_22 = arith.constant 0 : index
    %54 = vector.load %arg3[%c5, %c0_22] : memref<8x128xf32, #tpu.memory_space<vmem>>, vector<1x128xf32>
    tpu.vector_store %arg3[%c5, %c0_22], %53 {strides = array<i32>} : memref<8x128xf32, #tpu.memory_space<vmem>>, vector<1x128xf32>,
    %c6_i32 = arith.constant 6 : i32
    %55 = arith.addi %0, %c6_i32 : i32
    %56 = arith.index_cast %55 : i32 to index
    %57 = memref.load %arg1[%56] : memref<16xi32, #tpu.memory_space<smem>>
    %58 = arith.index_cast %57 : i32 to index
    %c0_23 = arith.constant 0 : index
    %c0_24 = arith.constant 0 : index
    %59 = vector.load %arg2[%58, %c0_23, %c0_24] : memref<512x1x128xf32, #tpu.memory_space<vmem>>, vector<1x1x128xf32>
    %60 = vector.shape_cast %59 : vector<1x1x128xf32> to vector<1x128xf32>
    %cst_25 = arith.constant 11.3137083 : f32
    %61 = vector.broadcast %cst_25 : f32 to vector<1x128xf32>
    %62 = arith.mulf %60, %61 : vector<1x128xf32>
    %c6 = arith.constant 6 : index
    %c0_26 = arith.constant 0 : index
    %63 = vector.load %arg3[%c6, %c0_26] : memref<8x128xf32, #tpu.memory_space<vmem>>, vector<1x128xf32>
    tpu.vector_store %arg3[%c6, %c0_26], %62 {strides = array<i32>} : memref<8x128xf32, #tpu.memory_space<vmem>>, vector<1x128xf32>,
    %c7_i32 = arith.constant 7 : i32
    %64 = arith.addi %0, %c7_i32 : i32
    %65 = arith.index_cast %64 : i32 to index
    %66 = memref.load %arg1[%65] : memref<16xi32, #tpu.memory_space<smem>>
    %67 = arith.index_cast %66 : i32 to index
    %c0_27 = arith.constant 0 : index
    %c0_28 = arith.constant 0 : index
    %68 = vector.load %arg2[%67, %c0_27, %c0_28] : memref<512x1x128xf32, #tpu.memory_space<vmem>>, vector<1x1x128xf32>
    %69 = vector.shape_cast %68 : vector<1x1x128xf32> to vector<1x128xf32>
    %cst_29 = arith.constant 11.3137083 : f32
    %70 = vector.broadcast %cst_29 : f32 to vector<1x128xf32>
    %71 = arith.mulf %69, %70 : vector<1x128xf32>
    %c7 = arith.constant 7 : index
    %c0_30 = arith.constant 0 : index
    %72 = vector.load %arg3[%c7, %c0_30] : memref<8x128xf32, #tpu.memory_space<vmem>>, vector<1x128xf32>
    tpu.vector_store %arg3[%c7, %c0_30], %71 {strides = array<i32>} : memref<8x128xf32, #tpu.memory_space<vmem>>, vector<1x128xf32>,
    return
  }
  func.func @transform_0(%arg0: i32, %arg1: memref<16xi32, #tpu.memory_space<smem>>) -> (i32, i32, i32) {
    %c0_i32 = arith.constant 0 : i32
    %c0_i32_0 = arith.constant 0 : i32
    %c0_i32_1 = arith.constant 0 : i32
    %c0_i32_2 = arith.constant 0 : i32
    return %c0_i32, %c0_i32_0, %c0_i32_1 : i32, i32, i32
  }
  func.func @transform_1(%arg0: i32, %arg1: memref<16xi32, #tpu.memory_space<smem>>) -> (i32, i32) {
    %c0_i32 = arith.constant 0 : i32
    %c0_i32_0 = arith.constant 0 : i32
    return %arg0, %c0_i32 : i32, i32
  }
}

</mosaic_0001>

<llo_original>
// kernel: embeddings_forward.1
$region0: #{embeddings_forward.1}
  #allocation0 [shape = 'u32[]', space=smem, size = 0x4, offset = 0x4, fixed_abs, tag = 'smem constant byte address 0x4 - core index']
  #allocation1 [shape = 'u32[144,128]{1,0:T(1,128)}', space=vmem, size = 0x12000, scoped, tag = 'internal scratch']
  #allocation2 [shape = 's32[1]{0}', space=sflag, size = 0x4, scoped, tag = 'scoped memory for embeddings_forward.1']
  #allocation3 [shape = 'u8[512]{0}', space=smem, size = 0x200, scoped, tag = 'prefetched SMEM operand 0']
  %s0 = inlined_call_operand.vmem [shape: s32[16], index: 0, kind: input, shape index: {}]
  %s1 = inlined_call_operand.hbm [shape: f32[512,1,128], index: 1, kind: input, shape index: {}]
  %s2 = inlined_call_operand.hbm [shape: f32[16,128], index: 2, kind: output, shape index: {}]
  %s3 = sld [smem:[#allocation0]]
  $region41: #{embeddings_forward.1} parent=0
    _
  %s5 = ssub.s32 1, %s3
  %s6 = scalar_select 0, %s5, %s3
  %s7 = sshll.u32 %s0, 4
  %s8 = int_to_ptr.vmem [resolvable:$true] %s7
  %10 = dma.vmem_to_smem %s8, 16, [#allocation3], [#allocation2]
  %11 = dma.done [#allocation2], 16
  %12 = sfence
  $region1: #{embeddings_forward.1} parent=0
    #allocation4 [shape = 'u8[262144]{0}', space=vmem, size = 0x40000, scoped, tag = 'input window, operand 1, single buffered']
    #allocation5 [shape = 's32[2]{0}', space=sflag, size = 0x8, scoped, tag = 'scoped memory for embeddings_forward.1']
    #allocation6 [shape = 's32[2]{0}', space=sflag, size = 0x8, scoped, tag = 'scoped memory for embeddings_forward.1']
    #allocation7 [shape = 'u8[8192]{0}', space=vmem, size = 0x2000, scoped, tag = 'output window, operand 0']
    %13 = vsyncpa [#allocation5], 0
    %14 = vsyncpa [#allocation6], 0
    %s15 = scalar_lea.sflag [#allocation6], 1
    %16 = vsyncpa %s15, 0
    loop: start=0, step=1, limit=4
    $region2: #{embeddings_forward.1} parent=1 // loop_pre_header
      _
    $region3: #{embeddings_forward.1} parent=1 // loop_header
      %s18 = sphi 0, %s22
      %p19 = scmp.ge.s32.totalorder %s18, 4
      %s26 = sphi 0, %s26
      %s28 = sphi 0, %s26
      %s29 = sphi 0, %s28
      %s43 = sphi 0, %s29
      %s49 = sphi 0, %s51
      %s52 = sphi 0, %s49
      %s53 = sphi 0, %s52
      %s69 = sphi 0, %s53
    $region4: #{embeddings_forward.1} parent=1 // loop_header_branch
      %21 = sbr.rel (%p19) target = $region8
    $region5: #{embeddings_forward.1} parent=1 // loop_body
      %s23 = ssub.s32 %s18, 1
      %s24 = ssub.s32 %s18, 2
      %s25 = sadd.s32 %s18, 1
      %s27 = sadd.s32 %s26, 1
      %p30 = scmp.eq.s32.totalorder %s18, 1
      %p31 = scmp.ne.s32.totalorder %s26, %s28
      %p32 = scmp.eq.s32.totalorder %s18, 0
      %p33 = por %p31, %p32
      %p34 = scmp.ne.s32.totalorder %s26, %s28
      %p35 = scmp.eq.s32.totalorder %s23, 1
      %p36 = por %p34, %p35
      %p37 = scmp.ne.s32.totalorder %s28, %s29
      %p38 = scmp.eq.s32.totalorder %s23, 0
      %p39 = por %p37, %p38
      %p40 = scmp.ne.s32.totalorder %s28, %s29
      %p41 = scmp.eq.s32.totalorder %s24, 1
      %p42 = por %p40, %p41
      %p44 = scmp.ne.s32.totalorder %s29, %s43
      %p45 = scmp.eq.s32.totalorder %s24, 0
      %p46 = por %p44, %p45
      %s47 = ssub.s32 %s18, %s25
      %p48 = scmp.eq.s32.totalorder %s47, 0
      %s50 = sadd.s32 %s49, 1
      %s51 = scalar_select %p48, %s49, %s50
      %p54 = pneg %p48
      %p55 = scmp.eq.s32.totalorder %s18, 1
      %p56 = por %p54, %p55
      %p57 = scmp.ne.s32.totalorder %s49, %s52
      %p58 = scmp.eq.s32.totalorder %s18, 0
      %p59 = por %p57, %p58
      %p60 = scmp.ne.s32.totalorder %s49, %s52
      %p61 = scmp.eq.s32.totalorder %s23, 1
      %p62 = por %p60, %p61
      %p63 = scmp.ne.s32.totalorder %s52, %s53
      %p64 = scmp.eq.s32.totalorder %s23, 0
      %p65 = por %p63, %p64
      %p66 = scmp.ne.s32.totalorder %s52, %s53
      %p67 = scmp.eq.s32.totalorder %s24, 1
      %p68 = por %p66, %p67
      %p70 = scmp.ne.s32.totalorder %s53, %s69
      %p71 = scmp.eq.s32.totalorder %s24, 0
      %p72 = por %p70, %p71
      %p73 = scmp.le.s32.totalorder 1, %s18
      %p74 = scmp.lt.s32.totalorder %s18, 3
      %p75 = pnand %p73, %p74
      %p76 = pneg %p75
      // Predicated region
      $region9: #{embeddings_forward.1} parent=5 // pred_check
        _
      $region10: #{embeddings_forward.1} parent=5 // pred_check_branch
        %78 = sbr.rel (%p75) target = $region12
      $region11: #{embeddings_forward.1} parent=5 // pred_region
        %s79 = ssub.s32 %s18, 1
        // Predicated region
        $region13: #{embeddings_forward.1} parent=11 // pred_check
          %p80 = pneg %p39
        $region14: #{embeddings_forward.1} parent=11 // pred_check_branch
          %82 = sbr.rel (%p80) target = $region16
        $region15: #{embeddings_forward.1} parent=11 // pred_region
          %s84 = ssub.s32 8192, 8192
          %85 = vsyncadd [#allocation5], %s84
          %s86 = sshll.u32 [#allocation4], 4
          %s87 = int_to_ptr.vmem [resolvable:$true] %s86
          %92 = dma.hbm_to_vmem [thread:$0]  %s1, 8192, %s87, [#allocation5], 16, 16, 1
        $region16: #{embeddings_forward.1} parent=11 // pred_fallthru
          _
      $region12: #{embeddings_forward.1} parent=5 // pred_fallthru
        _
      %p93 = scmp.lt.s32.totalorder %s18, 2
      // Predicated region
      $region17: #{embeddings_forward.1} parent=5 // pred_check
        %p94 = pneg %p93
      $region18: #{embeddings_forward.1} parent=5 // pred_check_branch
        %96 = sbr.rel (%p94) target = $region20
      $region19: #{embeddings_forward.1} parent=5 // pred_region
        _
      $region20: #{embeddings_forward.1} parent=5 // pred_fallthru
        _
      %p97 = scmp.le.s32.totalorder 1, %s18
      %p98 = scmp.lt.s32.totalorder %s18, 3
      %p99 = pnand %p97, %p98
      %p100 = pneg %p99
      // Predicated region
      $region21: #{embeddings_forward.1} parent=5 // pred_check
        _
      $region22: #{embeddings_forward.1} parent=5 // pred_check_branch
        %102 = sbr.rel (%p99) target = $region24
      $region23: #{embeddings_forward.1} parent=5 // pred_region
        %s103 = ssub.s32 %s18, 1
        // Predicated region
        $region25: #{embeddings_forward.1} parent=23 // pred_check
          %p104 = pneg %p39
        $region26: #{embeddings_forward.1} parent=23 // pred_check_branch
          %106 = sbr.rel (%p104) target = $region28
        $region27: #{embeddings_forward.1} parent=23 // pred_region
          %107 = dma.done [#allocation5], 8192
        $region28: #{embeddings_forward.1} parent=23 // pred_fallthru
          _
        %p108 = pneg %p39
        %p109 = pneg %p36
        %p110 = pneg %p65
        %p111 = pneg %p62
        %s112 = sand.u32 %s52, 1
        %s113 = scalar_lea.sflag [#allocation6], %s112
        %s114 = sand.u32 %s52, 1
        %s115 = smul.addr %s114, 8
        %s116 = scalar_lea.vmem [#allocation7], %s115
        %s117 = smul.u32 %s23, 8
        %s118 = sld [smem:[#allocation3 + %s117]]
        %s119 = scalar_lea.vmem [#allocation4], %s118
        %v120 = vld [vmem:[%s119] sm:$0x1]
        %v121 = vmul.f32 %v120, 11.313708
        %122 = vst [vmem:[%s116] sm:$0x1] %v121
        %s123 = sadd.s32 %s117, 1
        %s124 = sld [smem:[#allocation3 + %s123]]
        %s125 = scalar_lea.vmem [#allocation4], %s124
        %v126 = vld [vmem:[%s125] sm:$0x1]
        %v127 = vmul.f32 %v126, 11.313708
        %128 = vst [vmem:[%s116 + $0x1] sm:$0x1] %v127
        %s129 = sadd.s32 %s117, 2
        %s130 = sld [smem:[#allocation3 + %s129]]
        %s131 = scalar_lea.vmem [#allocation4], %s130
        %v132 = vld [vmem:[%s131] sm:$0x1]
        %v133 = vmul.f32 %v132, 11.313708
        %134 = vst [vmem:[%s116 + $0x2] sm:$0x1] %v133
        %s135 = sadd.s32 %s117, 3
        %s136 = sld [smem:[#allocation3 + %s135]]
        %s137 = scalar_lea.vmem [#allocation4], %s136
        %v138 = vld [vmem:[%s137] sm:$0x1]
        %v139 = vmul.f32 %v138, 11.313708
        %140 = vst [vmem:[%s116 + $0x3] sm:$0x1] %v139
        %s141 = sadd.s32 %s117, 4
        %s142 = sld [smem:[#allocation3 + %s141]]
        %s143 = scalar_lea.vmem [#allocation4], %s142
        %v144 = vld [vmem:[%s143] sm:$0x1]
        %v145 = vmul.f32 %v144, 11.313708
        %146 = vst [vmem:[%s116 + $0x4] sm:$0x1] %v145
        %s147 = sadd.s32 %s117, 5
        %s148 = sld [smem:[#allocation3 + %s147]]
        %s149 = scalar_lea.vmem [#allocation4], %s148
        %v150 = vld [vmem:[%s149] sm:$0x1]
        %v151 = vmul.f32 %v150, 11.313708
        %152 = vst [vmem:[%s116 + $0x5] sm:$0x1] %v151
        %s153 = sadd.s32 %s117, 6
        %s154 = sld [smem:[#allocation3 + %s153]]
        %s155 = scalar_lea.vmem [#allocation4], %s154
        %v156 = vld [vmem:[%s155] sm:$0x1]
        %v157 = vmul.f32 %v156, 11.313708
        %158 = vst [vmem:[%s116 + $0x6] sm:$0x1] %v157
        %s159 = sadd.s32 %s117, 7
        %s160 = sld [smem:[#allocation3 + %s159]]
        %s161 = scalar_lea.vmem [#allocation4], %s160
        %v162 = vld [vmem:[%s161] sm:$0x1]
        %v163 = vmul.f32 %v162, 11.313708
        %164 = vst [vmem:[%s116 + $0x7] sm:$0x1] %v163
        %s165 = sand.u32 %s52, 1
        %s166 = scalar_lea.sflag [#allocation6], %s165
        %s167 = sand.u32 %s52, 1
        %s168 = smul.addr %s167, 8
        %s169 = scalar_lea.vmem [#allocation7], %s168
        // Predicated region
        $region29: #{embeddings_forward.1} parent=23 // pred_check
          %p170 = pneg %p62
        $region30: #{embeddings_forward.1} parent=23 // pred_check_branch
          %172 = sbr.rel (%p170) target = $region32
        $region31: #{embeddings_forward.1} parent=23 // pred_region
          %s174 = ssub.s32 128, 128
          %175 = vsyncadd %s166, %s174
          %s176 = smul.addr %s23, 128
          %s177 = scalar_lea.hbm %s2, %s176
          %s179 = sshll.u32 %s169, 4
          %s180 = int_to_ptr.vmem [resolvable:$true] %s179
          %182 = dma.vmem_to_hbm [thread:$0]  %s180, 128, %s177, %s166
        $region32: #{embeddings_forward.1} parent=23 // pred_fallthru
          _
      $region24: #{embeddings_forward.1} parent=5 // pred_fallthru
        _
      %p183 = scmp.le.s32.totalorder 2, %s18
      // Predicated region
      $region33: #{embeddings_forward.1} parent=5 // pred_check
        %p184 = pneg %p183
      $region34: #{embeddings_forward.1} parent=5 // pred_check_branch
        %186 = sbr.rel (%p184) target = $region36
      $region35: #{embeddings_forward.1} parent=5 // pred_region
        %s187 = ssub.s32 %s18, 2
        // Predicated region
        $region37: #{embeddings_forward.1} parent=35 // pred_check
          %p188 = pneg %p68
        $region38: #{embeddings_forward.1} parent=35 // pred_check_branch
          %190 = sbr.rel (%p188) target = $region40
        $region39: #{embeddings_forward.1} parent=35 // pred_region
          %s191 = sand.u32 %s53, 1
          %s192 = scalar_lea.sflag [#allocation6], %s191
          %s193 = sand.u32 %s53, 1
          %s194 = smul.addr %s193, 8
          %s195 = scalar_lea.vmem [#allocation7], %s194
          %196 = dma.done %s192, 128
        $region40: #{embeddings_forward.1} parent=35 // pred_fallthru
          _
      $region36: #{embeddings_forward.1} parent=5 // pred_fallthru
        _
    $region6: #{embeddings_forward.1} parent=1 // loop_footer
      %s22 = sadd.s32 1, %s18
    $region7: #{embeddings_forward.1} parent=1 // loop_footer_branch
      %17 = sbr.rel target = $region3
    $region8: #{embeddings_forward.1} parent=1 // loop_exit
      _
    %197 = vsyncpa [#allocation5], 1
    %s198 = scalar_lea.sflag [#allocation5], 1
    %199 = vsyncpa %s198, 1
    %200 = vsyncpa [#allocation6], 1
    %s201 = scalar_lea.sflag [#allocation6], 1
    %202 = vsyncpa %s201, 1

</llo_original>
